<compile_context>
chip_gen: v7x
topology: tpu7x:2x2x1
jax: 0.10.0
libtpu: 0.0.40
codegen_flags: <defaults>
</compile_context>

<pallas_src>
import functools
import numpy as np
import jax
import jax.numpy as jnp
from jax.experimental import pallas as pl
from jax.experimental.pallas import tpu as pltpu


# bf16 matmul inputs + f32 accumulation.  Use jnp.float32 here for bit-exact
# parity with the f32 reference at the 0.5 decision boundary.
_COMPUTE_DTYPE = jnp.bfloat16
_OUT_DTYPE = jnp.bfloat16        # 0.0 / 1.0 are exact in bf16; halves writeback
_VMEM_LIMIT_BYTES = 32 << 20     # safe on v5e/v6e (128 MiB) and v7x (64 MiB)
_VMEM_BUDGET_BYTES = 16 << 20    # per-step working-set budget used for tiling


def _round_up(x, m):
    return ((x + m - 1) // m) * m


def _cdiv(a, b):
    return -(-a // b)


# ---------------------------------------------------------------------------
# Host-side interpolation-matrix builders (match PyTorch F.interpolate)
# ---------------------------------------------------------------------------
@functools.lru_cache(maxsize=None)
def bilinear_matrix(out_size, in_size):
    """PyTorch bilinear, align_corners=False, as a dense (out, in) matrix."""
    i = np.arange(out_size, dtype=np.float64)
    scale = in_size / out_size
    src = (i + 0.5) * scale - 0.5
    src = np.maximum(src, 0.0)
    i0 = np.minimum(np.floor(src).astype(np.int64), in_size - 1)
    i1 = np.minimum(i0 + 1, in_size - 1)
    l1 = src - i0
    l0 = 1.0 - l1
    M = np.zeros((out_size, in_size), dtype=np.float32)
    np.add.at(M, (np.arange(out_size), i0), l0)
    np.add.at(M, (np.arange(out_size), i1), l1)
    return M


@functools.lru_cache(maxsize=None)
def nearest_indices(out_size, in_size):
    """PyTorch mode='nearest' source index per output index."""
    scale = in_size / out_size
    return np.minimum(np.floor(np.arange(out_size) * scale).astype(np.int64),
                      in_size - 1)


# ---------------------------------------------------------------------------
# Fused kernel: (bilinear ∘ crop ∘ nearest) resize  +  threshold
# ---------------------------------------------------------------------------
def _fused_resize_threshold_kernel(x_ref, mh_ref, mwT_ref, o_ref):
    nb, h, w = x_ref.shape
    x = x_ref[...].astype(_COMPUTE_DTYPE)                    # (NB, H, W) logits
    mwT = mwT_ref[...]                                       # (W,  OWp) compute dtype
    mh = mh_ref[...]                                         # (OHp, H)  compute dtype

    # W-resize: one large-M matmul over the flattened mask block (M = NB*H).
    t = jnp.dot(x.reshape(nb * h, w), mwT,
                preferred_element_type=jnp.float32)          # (NB*H, OWp) f32
    t = t.reshape(nb, h, -1).astype(_COMPUTE_DTYPE)

    # H-resize per mask (NB is a static block size), fused with the threshold:
    #   sigmoid(y) > 0.5   <=>   y > 0
    # Each result is stored immediately -> only one y tile live at a time.
    for q in range(nb):
        y = jnp.dot(mh, t[q], preferred_element_type=jnp.float32)  # (OHp, OWp)
        o_ref[q] = (y > 0.0).astype(o_ref.dtype)


def fused_resize_threshold(masks, mh, mwT, nb):
    """masks: (Qp, H, W) logits; mh: (OHp, H); mwT: (W, OWp) fused matrices.
    Returns (Qp, OHp, OWp) 0/1 masks in _OUT_DTYPE."""
    Qp, H, W = masks.shape
    OHp = mh.shape[0]
    OWp = mwT.shape[1]
    return pl.pallas_call(
        _fused_resize_threshold_kernel,
        out_shape=jax.ShapeDtypeStruct((Qp, OHp, OWp), _OUT_DTYPE),
        grid_spec=pltpu.PrefetchScalarGridSpec(
            num_scalar_prefetch=0,
            grid=(Qp // nb,),
            in_specs=[
                pl.BlockSpec((nb, H, W), lambda q: (q, 0, 0)),
                pl.BlockSpec((OHp, H), lambda q: (0, 0)),
                pl.BlockSpec((W, OWp), lambda q: (0, 0)),
            ],
            out_specs=pl.BlockSpec((nb, OHp, OWp), lambda q: (q, 0, 0)),
        ),
        compiler_params=pltpu.CompilerParams(
            # "parallel" lets v7x shard the mask-block axis across its 2 TCs;
            # it is a no-op on v5e/v6e (single TC).
            dimension_semantics=("parallel",),
            vmem_limit_bytes=_VMEM_LIMIT_BYTES,
        ),
    )(masks, mh, mwT)


def _pick_block_masks(Q, H, W, ohp, owp, budget_bytes=_VMEM_BUDGET_BYTES):
    """Masks per grid step.  Per-mask cost: double-buffered input (f32) +
    double-buffered output (bf16) + f32/bf16 W-resized intermediate.
    Block-level overhead (one y tile + the broadcast matrices) is accounted
    once, not per mask."""
    block_overhead = (ohp * owp * 4                       # one y tile (f32)
                      + 2 * (ohp * H + W * owp) * 2)      # matrices (dbl-buf, bf16)
    per_mask = (2 * H * W * 4                             # input  f32, dbl-buf
                + 2 * ohp * owp * 2                       # output bf16, dbl-buf
                + H * owp * (4 + 2))                      # t in f32 + bf16
    nb = max(1, (budget_bytes - block_overhead) // per_mask)
    nb = int(min(nb, Q, 32))
    if Q >= 2 and _cdiv(Q, nb) < 2:     # keep >= 2 grid steps for v7x's 2nd TC
        nb = _cdiv(Q, 2)
    return max(1, nb)


# ---------------------------------------------------------------------------
# Forward (mirrors AVSPostProcess.forward)
# ---------------------------------------------------------------------------
def avs_post_process(outputs, resized_padded_sample_size, resized_sample_sizes,
                     orig_sample_sizes):
    pred_is_referred = outputs['pred_is_referred']    # (B, Q, C)
    pred_masks = outputs['pred_masks']                # (B, Q, H, W) logits

    # scores = softmax(pred_is_referred, dim=-1)[..., 0]
    # Tiny (B, Q, C) op: kept in XLA instead of paying a pallas_call launch.
    scores = jax.nn.softmax(pred_is_referred.astype(jnp.float32), axis=-1)[..., 0]

    B, Q, H, W = pred_masks.shape
    Hp, Wp = resized_padded_sample_size
    B_h = bilinear_matrix(Hp, H)                      # (Hp, H)
    B_w = bilinear_matrix(Wp, W)                      # (Wp, W)

    predictions = []
    # TODO(synk): in production, bucket (h_crop, w_crop, oh, ow) to a small
    # set of padded shapes so the fused kernel compiles once per bucket.
    for b in range(B):
        h_crop, w_crop = resized_sample_sizes[b]
        oh, ow = orig_sample_sizes[b]

        # Pre-compose crop + nearest into the bilinear matrices (exact:
        # crop / nearest are pure row- and column-selections).
        mh = B_h[:h_crop, :][nearest_indices(oh, h_crop), :]        # (oh, H)
        mwT = B_w[:w_crop, :][nearest_indices(ow, w_crop), :].T     # (W, ow)

        # Pad to sublane/lane-dense output tiles: rows to 16 (bf16 sublane
        # pack), cols to 128 (lane width) -> unmasked vst on writeback.
        # Padded rows/cols are all-zero -> threshold to 0 -> cropped below.
        ohp, owp = _round_up(oh, 16), _round_up(ow, 128)
        mh_p = np.zeros((ohp, H), np.float32)
        mh_p[:oh] = mh
        mwT_p = np.zeros((W, owp), np.float32)
        mwT_p[:, :ow] = mwT

        nb = _pick_block_masks(Q, H, W, ohp, owp)
        Qp = _cdiv(Q, nb) * nb
        x = pred_masks[b]                                           # (Q, H, W)
        if Qp != Q:
            x = jnp.pad(x, ((0, Qp - Q), (0, 0), (0, 0)))

        masks_p = fused_resize_threshold(
            x,
            jnp.asarray(mh_p, dtype=_COMPUTE_DTYPE),   # shipped pre-cast: half DMA
            jnp.asarray(mwT_p, dtype=_COMPUTE_DTYPE),
            nb)                                                     # (Qp,OHp,OWp)
        # 0/1 values are exact in bf16; cast downstream if f32 masks are needed.
        masks = masks_p[:Q, :oh, :ow][:, None, :, :]                # (Q,1,oh,ow)

        # TODO(synk): pycocotools mask_util.encode (RLE) is host-side CPU code
        # with no Pallas equivalent; rle_masks left as None.
        predictions.append({'scores': scores[b], 'masks': masks,
                            'rle_masks': None})
    return predictions


if __name__ == "__main__":
    key = jax.random.PRNGKey(0)
    B, Q, C = 2, 4, 2
    H, W = 16, 16
    k1, k2 = jax.random.split(key)
    pred_is_referred = jax.random.normal(k1, (B, Q, C), dtype=jnp.float32)
    pred_masks = jax.random.normal(k2, (B, Q, H, W), dtype=jnp.float32)
    outputs = {'pred_is_referred': pred_is_referred, 'pred_masks': pred_masks}

    resized_padded_sample_size = (32, 32)
    resized_sample_sizes = [(28, 30), (24, 32)]
    orig_sample_sizes = [(20, 22), (36, 40)]

    preds = avs_post_process(outputs, resized_padded_sample_size,
                             resized_sample_sizes, orig_sample_sizes)
    for p in preds:
        jax.block_until_ready(p['scores'])
        jax.block_until_ready(p['masks'])
    print("KERNEL_OK")
</pallas_src>

<mosaic_0001>
module attributes {stable_mosaic.version = 11 : i64} {
  func.func @_fused_resize_threshold_kernel(%arg0: i32, %arg1: memref<2x16x16xf32, #tpu.memory_space<vmem>>, %arg2: memref<32x16xbf16, #tpu.memory_space<vmem>>, %arg3: memref<16x128xbf16, #tpu.memory_space<vmem>>, %arg4: memref<2x32x128xbf16, #tpu.memory_space<vmem>>) attributes {dimension_semantics = [#tpu.dimension_semantics<parallel>], iteration_bounds = array<i64: 2>, scalar_prefetch = 0 : i64, scratch_operands = 0 : i64, tpu.core_type = #tpu.core_type<tc>, window_params = [{transform_indices = @transform_0, window_bounds = array<i64: 2, 16, 16>}, {pipeline_mode = #tpu.pipeline_mode<synchronous>, transform_indices = @transform_1, window_bounds = array<i64: 32, 16>}, {pipeline_mode = #tpu.pipeline_mode<synchronous>, transform_indices = @transform_2, window_bounds = array<i64: 16, 128>}, {transform_indices = @transform_3, window_bounds = array<i64: 2, 32, 128>}]} {
    %c0 = arith.constant 0 : index
    %c0_0 = arith.constant 0 : index
    %c0_1 = arith.constant 0 : index
    %0 = vector.load %arg1[%c0, %c0_0, %c0_1] : memref<2x16x16xf32, #tpu.memory_space<vmem>>, vector<2x16x16xf32>
    %1 = arith.truncf %0 : vector<2x16x16xf32> to vector<2x16x16xbf16>
    %c0_2 = arith.constant 0 : index
    %c0_3 = arith.constant 0 : index
    %2 = vector.load %arg3[%c0_2, %c0_3] : memref<16x128xbf16, #tpu.memory_space<vmem>>, vector<16x128xbf16>
    %c0_4 = arith.constant 0 : index
    %c0_5 = arith.constant 0 : index
    %3 = vector.load %arg2[%c0_4, %c0_5] : memref<32x16xbf16, #tpu.memory_space<vmem>>, vector<32x16xbf16>
    %4 = vector.shape_cast %1 : vector<2x16x16xbf16> to vector<32x16xbf16>
    %cst = arith.constant dense<0.000000e+00> : vector<32x128xf32>
    %5 = tpu.matmul %4, %2, %cst {dimension_numbers = #tpu.dot_dimension_numbers<[1], [0], [0], [1], [0, 0, 1, 1], [], []>} : vector<32x16xbf16>, vector<16x128xbf16>, vector<32x128xf32> -> vector<32x128xf32>
    %6 = vector.shape_cast %5 : vector<32x128xf32> to vector<2x16x128xf32>
    %7 = arith.truncf %6 : vector<2x16x128xf32> to vector<2x16x128xbf16>
    %8 = vector.extract_strided_slice %7 {offsets = [0, 0, 0], sizes = [1, 16, 128], strides = [1, 1, 1]} : vector<2x16x128xbf16> to vector<1x16x128xbf16>
    %9 = vector.shape_cast %8 : vector<1x16x128xbf16> to vector<16x128xbf16>
    %cst_6 = arith.constant dense<0.000000e+00> : vector<32x128xf32>
    %10 = tpu.matmul %3, %9, %cst_6 {dimension_numbers = #tpu.dot_dimension_numbers<[1], [0], [0], [1], [0, 0, 1, 1], [], []>} : vector<32x16xbf16>, vector<16x128xbf16>, vector<32x128xf32> -> vector<32x128xf32>
    %cst_7 = arith.constant 0.000000e+00 : f32
    %11 = vector.broadcast %cst_7 : f32 to vector<32x128xf32>
    %12 = arith.cmpf ogt, %10, %11 : vector<32x128xf32>
    %13 = arith.extui %12 : vector<32x128xi1> to vector<32x128xi32>
    %14 = arith.sitofp %13 : vector<32x128xi32> to vector<32x128xf32>
    %15 = arith.truncf %14 : vector<32x128xf32> to vector<32x128xbf16>
    %c0_8 = arith.constant 0 : index
    %c0_9 = arith.constant 0 : index
    %c0_10 = arith.constant 0 : index
    %16 = vector.load %arg4[%c0_8, %c0_9, %c0_10] : memref<2x32x128xbf16, #tpu.memory_space<vmem>>, vector<1x32x128xbf16>
    %17 = vector.shape_cast %16 : vector<1x32x128xbf16> to vector<32x128xbf16>
    %18 = vector.shape_cast %15 : vector<32x128xbf16> to vector<1x32x128xbf16>
    tpu.vector_store %arg4[%c0_8, %c0_9, %c0_10], %18 {strides = array<i32>} : memref<2x32x128xbf16, #tpu.memory_space<vmem>>, vector<1x32x128xbf16>,
    %19 = vector.extract_strided_slice %7 {offsets = [1, 0, 0], sizes = [1, 16, 128], strides = [1, 1, 1]} : vector<2x16x128xbf16> to vector<1x16x128xbf16>
    %20 = vector.shape_cast %19 : vector<1x16x128xbf16> to vector<16x128xbf16>
    %cst_11 = arith.constant dense<0.000000e+00> : vector<32x128xf32>
    %21 = tpu.matmul %3, %20, %cst_11 {dimension_numbers = #tpu.dot_dimension_numbers<[1], [0], [0], [1], [0, 0, 1, 1], [], []>} : vector<32x16xbf16>, vector<16x128xbf16>, vector<32x128xf32> -> vector<32x128xf32>
    %cst_12 = arith.constant 0.000000e+00 : f32
    %22 = vector.broadcast %cst_12 : f32 to vector<32x128xf32>
    %23 = arith.cmpf ogt, %21, %22 : vector<32x128xf32>
    %24 = arith.extui %23 : vector<32x128xi1> to vector<32x128xi32>
    %25 = arith.sitofp %24 : vector<32x128xi32> to vector<32x128xf32>
    %26 = arith.truncf %25 : vector<32x128xf32> to vector<32x128xbf16>
    %c1 = arith.constant 1 : index
    %c0_13 = arith.constant 0 : index
    %c0_14 = arith.constant 0 : index
    %27 = vector.load %arg4[%c1, %c0_13, %c0_14] : memref<2x32x128xbf16, #tpu.memory_space<vmem>>, vector<1x32x128xbf16>
    %28 = vector.shape_cast %27 : vector<1x32x128xbf16> to vector<32x128xbf16>
    %29 = vector.shape_cast %26 : vector<32x128xbf16> to vector<1x32x128xbf16>
    tpu.vector_store %arg4[%c1, %c0_13, %c0_14], %29 {strides = array<i32>} : memref<2x32x128xbf16, #tpu.memory_space<vmem>>, vector<1x32x128xbf16>,
    return
  }
  func.func @transform_0(%arg0: i32) -> (i32, i32, i32) {
    %c0_i32 = arith.constant 0 : i32
    %c0_i32_0 = arith.constant 0 : i32
    %c0_i32_1 = arith.constant 0 : i32
    return %arg0, %c0_i32, %c0_i32_0 : i32, i32, i32
  }
  func.func @transform_1(%arg0: i32) -> (i32, i32) {
    %c0_i32 = arith.constant 0 : i32
    %c0_i32_0 = arith.constant 0 : i32
    %c0_i32_1 = arith.constant 0 : i32
    return %c0_i32, %c0_i32_0 : i32, i32
  }
  func.func @transform_2(%arg0: i32) -> (i32, i32) {
    %c0_i32 = arith.constant 0 : i32
    %c0_i32_0 = arith.constant 0 : i32
    %c0_i32_1 = arith.constant 0 : i32
    return %c0_i32, %c0_i32_0 : i32, i32
  }
  func.func @transform_3(%arg0: i32) -> (i32, i32, i32) {
    %c0_i32 = arith.constant 0 : i32
    %c0_i32_0 = arith.constant 0 : i32
    %c0_i32_1 = arith.constant 0 : i32
    return %arg0, %c0_i32, %c0_i32_0 : i32, i32, i32
  }
}

</mosaic_0001>

<llo_original>
// kernel: tpu_custom_call.1
$region0: #{tpu_custom_call.1}
  #allocation0 [shape = 'u32[]', space=smem, size = 0x4, offset = 0x4, fixed_abs, tag = 'smem constant byte address 0x4 - core index']
  #allocation1 [shape = 'u32[144,128]{1,0:T(1,128)}', space=vmem, size = 0x12000, scoped, tag = 'internal scratch']
  %s0 = inlined_call_operand.hbm [shape: f32[4,16,16], index: 0, kind: input, shape index: {}]
  %s1 = inlined_call_operand.vmem [shape: bf16[32,16], index: 1, kind: input, shape index: {}]
  %s2 = inlined_call_operand.vmem [shape: bf16[16,128], index: 2, kind: input, shape index: {}]
  %s3 = inlined_call_operand.hbm [shape: bf16[4,32,128], index: 3, kind: output, shape index: {}]
  %s4 = sld [smem:[#allocation0]]
  $region49: #{tpu_custom_call.1} parent=0
    _
  %s6 = ssub.s32 1, %s4
  %s7 = scalar_select 0, %s6, %s4
  $region1: #{tpu_custom_call.1} parent=0
    #allocation2 [shape = 'u8[32768]{0}', space=vmem, size = 0x8000, scoped, tag = 'input window, operand 0']
    #allocation3 [shape = 's32[2]{0}', space=sflag, size = 0x8, scoped, tag = 'scoped memory for tpu_custom_call.1']
    #allocation4 [shape = 's32[2]{0}', space=sflag, size = 0x8, scoped, tag = 'scoped memory for tpu_custom_call.1']
    #allocation5 [shape = 'u8[32768]{0}', space=vmem, size = 0x8000, scoped, tag = 'output window, operand 0']
    %8 = vsyncpa [#allocation3], 0
    %s9 = scalar_lea.sflag [#allocation3], 1
    %10 = vsyncpa %s9, 0
    %11 = vsyncpa [#allocation4], 0
    %s12 = scalar_lea.sflag [#allocation4], 1
    %13 = vsyncpa %s12, 0
    loop: start=0, step=1, limit=4
    $region2: #{tpu_custom_call.1} parent=1 // loop_pre_header
      _
    $region3: #{tpu_custom_call.1} parent=1 // loop_header
      %s15 = sphi 0, %s19
      %p16 = scmp.ge.s32.totalorder %s15, 4
      %s25 = sphi 0, %s27
      %s28 = sphi 0, %s25
      %s29 = sphi 0, %s28
      %s45 = sphi 0, %s29
      %s49 = sphi 0, %s49
      %s51 = sphi 0, %s49
      %s52 = sphi 0, %s51
      %s66 = sphi 0, %s52
      %s70 = sphi 0, %s70
      %s72 = sphi 0, %s70
      %s73 = sphi 0, %s72
      %s87 = sphi 0, %s73
      %s93 = sphi 0, %s95
      %s96 = sphi 0, %s93
      %s97 = sphi 0, %s96
      %s113 = sphi 0, %s97
    $region4: #{tpu_custom_call.1} parent=1 // loop_header_branch
      %18 = sbr.rel (%p16) target = $region8
    $region5: #{tpu_custom_call.1} parent=1 // loop_body
      %s20 = ssub.s32 %s15, 1
      %s21 = ssub.s32 %s15, 2
      %s22 = sadd.s32 %s15, 1
      %s23 = ssub.s32 %s15, %s22
      %p24 = scmp.eq.s32.totalorder %s23, 0
      %s26 = sadd.s32 %s25, 1
      %s27 = scalar_select %p24, %s25, %s26
      %p30 = pneg %p24
      %p31 = scmp.eq.s32.totalorder %s15, 1
      %p32 = por %p30, %p31
      %p33 = scmp.ne.s32.totalorder %s25, %s28
      %p34 = scmp.eq.s32.totalorder %s15, 0
      %p35 = por %p33, %p34
      %p36 = scmp.ne.s32.totalorder %s25, %s28
      %p37 = scmp.eq.s32.totalorder %s20, 1
      %p38 = por %p36, %p37
      %p39 = scmp.ne.s32.totalorder %s28, %s29
      %p40 = scmp.eq.s32.totalorder %s20, 0
      %p41 = por %p39, %p40
      %p42 = scmp.ne.s32.totalorder %s28, %s29
      %p43 = scmp.eq.s32.totalorder %s21, 1
      %p44 = por %p42, %p43
      %p46 = scmp.ne.s32.totalorder %s29, %s45
      %p47 = scmp.eq.s32.totalorder %s21, 0
      %p48 = por %p46, %p47
      %s50 = sadd.s32 %s49, 1
      %p53 = scmp.eq.s32.totalorder %s15, 1
      %p54 = scmp.ne.s32.totalorder %s49, %s51
      %p55 = scmp.eq.s32.totalorder %s15, 0
      %p56 = por %p54, %p55
      %p57 = scmp.ne.s32.totalorder %s49, %s51
      %p58 = scmp.eq.s32.totalorder %s20, 1
      %p59 = por %p57, %p58
      %p60 = scmp.ne.s32.totalorder %s51, %s52
      %p61 = scmp.eq.s32.totalorder %s20, 0
      %p62 = por %p60, %p61
      %p63 = scmp.ne.s32.totalorder %s51, %s52
      %p64 = scmp.eq.s32.totalorder %s21, 1
      %p65 = por %p63, %p64
      %p67 = scmp.ne.s32.totalorder %s52, %s66
      %p68 = scmp.eq.s32.totalorder %s21, 0
      %p69 = por %p67, %p68
      %s71 = sadd.s32 %s70, 1
      %p74 = scmp.eq.s32.totalorder %s15, 1
      %p75 = scmp.ne.s32.totalorder %s70, %s72
      %p76 = scmp.eq.s32.totalorder %s15, 0
      %p77 = por %p75, %p76
      %p78 = scmp.ne.s32.totalorder %s70, %s72
      %p79 = scmp.eq.s32.totalorder %s20, 1
      %p80 = por %p78, %p79
      %p81 = scmp.ne.s32.totalorder %s72, %s73
      %p82 = scmp.eq.s32.totalorder %s20, 0
      %p83 = por %p81, %p82
      %p84 = scmp.ne.s32.totalorder %s72, %s73
      %p85 = scmp.eq.s32.totalorder %s21, 1
      %p86 = por %p84, %p85
      %p88 = scmp.ne.s32.totalorder %s73, %s87
      %p89 = scmp.eq.s32.totalorder %s21, 0
      %p90 = por %p88, %p89
      %s91 = ssub.s32 %s15, %s22
      %p92 = scmp.eq.s32.totalorder %s91, 0
      %s94 = sadd.s32 %s93, 1
      %s95 = scalar_select %p92, %s93, %s94
      %p98 = pneg %p92
      %p99 = scmp.eq.s32.totalorder %s15, 1
      %p100 = por %p98, %p99
      %p101 = scmp.ne.s32.totalorder %s93, %s96
      %p102 = scmp.eq.s32.totalorder %s15, 0
      %p103 = por %p101, %p102
      %p104 = scmp.ne.s32.totalorder %s93, %s96
      %p105 = scmp.eq.s32.totalorder %s20, 1
      %p106 = por %p104, %p105
      %p107 = scmp.ne.s32.totalorder %s96, %s97
      %p108 = scmp.eq.s32.totalorder %s20, 0
      %p109 = por %p107, %p108
      %p110 = scmp.ne.s32.totalorder %s96, %s97
      %p111 = scmp.eq.s32.totalorder %s21, 1
      %p112 = por %p110, %p111
      %p114 = scmp.ne.s32.totalorder %s97, %s113
      %p115 = scmp.eq.s32.totalorder %s21, 0
      %p116 = por %p114, %p115
      %p117 = scmp.le.s32.totalorder 1, %s15
      %p118 = scmp.lt.s32.totalorder %s15, 3
      %p119 = pnand %p117, %p118
      %p120 = pneg %p119
      // Predicated region
      $region9: #{tpu_custom_call.1} parent=5 // pred_check
        _
      $region10: #{tpu_custom_call.1} parent=5 // pred_check_branch
        %122 = sbr.rel (%p119) target = $region12
      $region11: #{tpu_custom_call.1} parent=5 // pred_region
        %s123 = ssub.s32 %s15, 1
        // Predicated region
        $region13: #{tpu_custom_call.1} parent=11 // pred_check
          %p124 = pneg %p62
        $region14: #{tpu_custom_call.1} parent=11 // pred_check_branch
          %126 = sbr.rel (%p124) target = $region16
        $region15: #{tpu_custom_call.1} parent=11 // pred_region
          _
        $region16: #{tpu_custom_call.1} parent=11 // pred_fallthru
          _
        // Predicated region
        $region17: #{tpu_custom_call.1} parent=11 // pred_check
          %p127 = pneg %p83
        $region18: #{tpu_custom_call.1} parent=11 // pred_check_branch
          %129 = sbr.rel (%p127) target = $region20
        $region19: #{tpu_custom_call.1} parent=11 // pred_region
          _
        $region20: #{tpu_custom_call.1} parent=11 // pred_fallthru
          _
      $region12: #{tpu_custom_call.1} parent=5 // pred_fallthru
        _
      %p130 = scmp.lt.s32.totalorder %s15, 2
      // Predicated region
      $region21: #{tpu_custom_call.1} parent=5 // pred_check
        %p131 = pneg %p130
      $region22: #{tpu_custom_call.1} parent=5 // pred_check_branch
        %133 = sbr.rel (%p131) target = $region24
      $region23: #{tpu_custom_call.1} parent=5 // pred_region
        // Predicated region
        $region25: #{tpu_custom_call.1} parent=23 // pred_check
          %p134 = pneg %p35
        $region26: #{tpu_custom_call.1} parent=23 // pred_check_branch
          %136 = sbr.rel (%p134) target = $region28
        $region27: #{tpu_custom_call.1} parent=23 // pred_region
          %s137 = sand.u32 %s25, 1
          %s138 = scalar_lea.sflag [#allocation3], %s137
          %s139 = sand.u32 %s25, 1
          %s140 = smul.addr %s139, 32
          %s141 = scalar_lea.vmem [#allocation2], %s140
          %s142 = smul.u32 2, %s15
          %s144 = ssub.s32 512, 512
          %145 = vsyncadd %s138, %s144
          %s146 = smul.addr %s142, 2
          %s147 = smul.addr %s146, 128
          %s148 = scalar_lea.hbm %s0, %s147
          %s149 = sshll.u32 %s141, 4
          %s150 = int_to_ptr.vmem [resolvable:$true] %s149
          %155 = dma.hbm_to_vmem [thread:$0]  %s148, 512, %s150, %s138, 128, 128, 8
        $region28: #{tpu_custom_call.1} parent=23 // pred_fallthru
          _
      $region24: #{tpu_custom_call.1} parent=5 // pred_fallthru
        _
      %p156 = scmp.le.s32.totalorder 1, %s15
      %p157 = scmp.lt.s32.totalorder %s15, 3
      %p158 = pnand %p156, %p157
      %p159 = pneg %p158
      // Predicated region
      $region29: #{tpu_custom_call.1} parent=5 // pred_check
        _
      $region30: #{tpu_custom_call.1} parent=5 // pred_check_branch
        %161 = sbr.rel (%p158) target = $region32
      $region31: #{tpu_custom_call.1} parent=5 // pred_region
        %s162 = ssub.s32 %s15, 1
        %s163 = sand.u32 %s28, 1
        %s164 = scalar_lea.sflag [#allocation3], %s163
        %s165 = sand.u32 %s28, 1
        %s166 = smul.addr %s165, 32
        %s167 = scalar_lea.vmem [#allocation2], %s166
        // Predicated region
        $region33: #{tpu_custom_call.1} parent=31 // pred_check
          %p168 = pneg %p41
        $region34: #{tpu_custom_call.1} parent=31 // pred_check_branch
          %170 = sbr.rel (%p168) target = $region36
        $region35: #{tpu_custom_call.1} parent=31 // pred_region
          %171 = dma.done %s164, 512
        $region36: #{tpu_custom_call.1} parent=31 // pred_fallthru
          _
        %s172 = sand.u32 %s28, 1
        %s173 = scalar_lea.sflag [#allocation3], %s172
        %s174 = sand.u32 %s28, 1
        %s175 = smul.addr %s174, 32
        %s176 = scalar_lea.vmem [#allocation2], %s175
        %p177 = pneg %p41
        %p178 = pneg %p38
        %p179 = pneg %p62
        %p180 = pneg %p59
        %p181 = pneg %p83
        %p182 = pneg %p80
        %p183 = pneg %p109
        %p184 = pneg %p106
        %s185 = sand.u32 %s96, 1
        %s186 = scalar_lea.sflag [#allocation4], %s185
        %s187 = sand.u32 %s96, 1
        %s188 = smul.addr %s187, 32
        %s189 = scalar_lea.vmem [#allocation5], %s188
        %s190 = smul.u32 2, %s20
        %s191 = smul.u32 2, %s20
        %v193 = vld [vmem:[%s167] sm:$0xff]
        %v194 = vld [vmem:[%s167 + $0x8] sm:$0xff]
        %v195 = vld [vmem:[%s167 + $0x10] sm:$0xff]
        %v196 = vld [vmem:[%s167 + $0x18] sm:$0xff]
        %v197 = vpack.c.bf16 %v194, %v193
        %v198 = vpack.c.bf16 %v196, %v195
        %v199 = vld [vmem:[%s2] sm:$0xf]
        %v200 = vld [vmem:[%s2 + $0x4] sm:$0xf]
        %v201 = vld [vmem:[%s1] sm:$0xf]
        %v202 = vld [vmem:[%s1 + $0x4] sm:$0xf]
        %v203 = vld [vmem:[%s1 + $0x8] sm:$0xf]
        %v204 = vld [vmem:[%s1 + $0xc] sm:$0xf]
        %v207 = vunpack.c.l.b16 %v199
        %v208 = vunpack.c.l.b16 %v200
        %v209 = vpack.c.b16 %v208, %v207
        %vm211 = vcmask 130048
        %v213 = vsel %vm211, %v197, 0
        %v216 = vsel %vm211, %v198, 0
        %218 = vmatprep.subr.bf16.mxu0 0
        %219 = vmatpush1.bf16.msra.mxu0 %v209
        %220 = vmatprep.subr.bf16.mxu0 0
        %221 = vmatpush1.bf16.msra.mxu0 0
        %222 = vmatprep.subr.bf16.mxu0 0
        %223 = vmatpush1.bf16.msra.mxu0 0
        %224 = vmatprep.subr.bf16.mxu0 0
        %225 = vmatpush1.bf16.msra.mxu0 0
        %226 = vmatprep.subr.bf16.mxu0 0
        %227 = vmatpush1.bf16.msra.mxu0 0
        %228 = vmatprep.subr.bf16.mxu0 0
        %229 = vmatpush1.bf16.msra.mxu0 0
        %230 = vmatprep.subr.bf16.mxu0 0
        %231 = vmatpush1.bf16.msra.mxu0 0
        %232 = vmatprep.subr.bf16.mxu0 0
        %233 = vmatpush1.bf16.msra.mxu0 0
        %234 = vmatprep.subr.bf16.mxu0 0
        %235 = vmatpush1.bf16.msra.mxu0 0
        %236 = vmatprep.subr.bf16.mxu0 0
        %237 = vmatpush1.bf16.msra.mxu0 0
        %238 = vmatprep.subr.bf16.mxu0 0
        %239 = vmatpush1.bf16.msra.mxu0 0
        %240 = vmatprep.subr.bf16.mxu0 0
        %241 = vmatpush1.bf16.msra.mxu0 0
        %242 = vmatprep.subr.bf16.mxu0 0
        %243 = vmatpush1.bf16.msra.mxu0 0
        %244 = vmatprep.subr.bf16.mxu0 0
        %245 = vmatpush1.bf16.msra.mxu0 0
        %246 = vmatprep.subr.bf16.mxu0 0
        %247 = vmatpush1.bf16.msra.mxu0 0
        %248 = vmatprep.subr.bf16.mxu0 0
        %249 = vmatpush1.bf16.msra.mxu0 0
        %250 = vmatprep.mubr.bf16.mxu0 0
        %251 = vmatmul.mubr.bf16.gmra.mrb[0].mxu0 %v213
        %v252 = vpop.f32.mrb[0].mxu0
        %v253 = vadd.f32 0.0, %v252
        %v254 = vpop.f32.mrb[0].mxu0
        %v255 = vpop.f32.mrb[0].mxu0
        %v256 = vadd.f32 0.0, %v255
        %v257 = vpop.f32.mrb[0].mxu0
        %258 = vmatprep.mubr.bf16.mxu0 0
        %259 = vmatmul.mubr.bf16.gmra.mrb[0].mxu0 %v216
        %v260 = vpop.f32.mrb[0].mxu0
        %v261 = vadd.f32 0.0, %v260
        %v262 = vpop.f32.mrb[0].mxu0
        %v263 = vpop.f32.mrb[0].mxu0
        %v264 = vadd.f32 0.0, %v263
        %v265 = vpop.f32.mrb[0].mxu0
        %266 = vdwg.mxu0
        %v267 = vpack.c.bf16 %v256, %v253
        %v268 = vpack.c.bf16 %v264, %v261
        %v273 = vunpack.c.l.b16 %v201
        %v274 = vunpack.c.l.b16 %v202
        %v275 = vunpack.c.l.b16 %v203
        %v276 = vunpack.c.l.b16 %v204
        %v277 = vpack.c.b16 %v274, %v273
        %v278 = vpack.c.b16 %v276, %v275
        %v280 = vsel %vm211, %v277, 0
        %v283 = vsel %vm211, %v278, 0
        %285 = vmatprep.subr.bf16.mxu0 0
        %286 = vmatpush1.bf16.msra.mxu0 %v267
        %287 = vmatprep.subr.bf16.mxu0 0
        %288 = vmatpush1.bf16.msra.mxu0 0
        %289 = vmatprep.subr.bf16.mxu0 0
        %290 = vmatpush1.bf16.msra.mxu0 0
        %291 = vmatprep.subr.bf16.mxu0 0
        %292 = vmatpush1.bf16.msra.mxu0 0
        %293 = vmatprep.subr.bf16.mxu0 0
        %294 = vmatpush1.bf16.msra.mxu0 0
        %295 = vmatprep.subr.bf16.mxu0 0
        %296 = vmatpush1.bf16.msra.mxu0 0
        %297 = vmatprep.subr.bf16.mxu0 0
        %298 = vmatpush1.bf16.msra.mxu0 0
        %299 = vmatprep.subr.bf16.mxu0 0
        %300 = vmatpush1.bf16.msra.mxu0 0
        %301 = vmatprep.subr.bf16.mxu0 0
        %302 = vmatpush1.bf16.msra.mxu0 0
        %303 = vmatprep.subr.bf16.mxu0 0
        %304 = vmatpush1.bf16.msra.mxu0 0
        %305 = vmatprep.subr.bf16.mxu0 0
        %306 = vmatpush1.bf16.msra.mxu0 0
        %307 = vmatprep.subr.bf16.mxu0 0
        %308 = vmatpush1.bf16.msra.mxu0 0
        %309 = vmatprep.subr.bf16.mxu0 0
        %310 = vmatpush1.bf16.msra.mxu0 0
        %311 = vmatprep.subr.bf16.mxu0 0
        %312 = vmatpush1.bf16.msra.mxu0 0
        %313 = vmatprep.subr.bf16.mxu0 0
        %314 = vmatpush1.bf16.msra.mxu0 0
        %315 = vmatprep.subr.bf16.mxu0 0
        %316 = vmatpush1.bf16.msra.mxu0 0
        %317 = vmatprep.mubr.bf16.mxu0 0
        %318 = vmatmul.mubr.bf16.gmra.mrb[0].mxu0 %v280
        %v319 = vpop.f32.mrb[0].mxu0
        %v320 = vadd.f32 0.0, %v319
        %v321 = vpop.f32.mrb[0].mxu0
        %v322 = vpop.f32.mrb[0].mxu0
        %v323 = vadd.f32 0.0, %v322
        %v324 = vpop.f32.mrb[0].mxu0
        %325 = vmatprep.mubr.bf16.mxu0 0
        %326 = vmatmul.mubr.bf16.gmra.mrb[0].mxu0 %v283
        %v327 = vpop.f32.mrb[0].mxu0
        %v328 = vadd.f32 0.0, %v327
        %v329 = vpop.f32.mrb[0].mxu0
        %v330 = vpop.f32.mrb[0].mxu0
        %v331 = vadd.f32 0.0, %v330
        %v332 = vpop.f32.mrb[0].mxu0
        %333 = vdwg.mxu0
        %vm334 = vcmp.gt.f32.partialorder %v320, 0.0
        %vm335 = vcmp.gt.f32.partialorder %v323, 0.0
        %vm336 = vcmp.gt.f32.partialorder %v328, 0.0
        %vm337 = vcmp.gt.f32.partialorder %v331, 0.0
        %v338 = vsel %vm334, 1, 0
        %v339 = vsel %vm335, 1, 0
        %v340 = vsel %vm336, 1, 0
        %v341 = vsel %vm337, 1, 0
        %v342 = vcvt.s32.f32 %v338
        %v343 = vcvt.s32.f32 %v339
        %v344 = vcvt.s32.f32 %v340
        %v345 = vcvt.s32.f32 %v341
        %v346 = vpack.c.bf16 %v343, %v342
        %v347 = vpack.c.bf16 %v345, %v344
        %v350 = vunpack.c.l.b16 %v346
        %v351 = vunpack.c.h.b16 %v346
        %v352 = vunpack.c.l.b16 %v347
        %v353 = vunpack.c.h.b16 %v347
        %v354 = vpack.c.b16 %v350, %v350
        %v355 = vpack.c.b16 %v351, %v351
        %v356 = vpack.c.b16 %v352, %v352
        %v357 = vpack.c.b16 %v353, %v353
        %362 = vst [vmem:[%s189] sm:$0xf] %v354
        %363 = vst [vmem:[%s189 + $0x4] sm:$0xf] %v355
        %364 = vst [vmem:[%s189 + $0x8] sm:$0xf] %v356
        %365 = vst [vmem:[%s189 + $0xc] sm:$0xf] %v357
        %366 = vmatprep.subr.bf16.mxu0 0
        %367 = vmatpush1.bf16.msra.mxu0 %v268
        %368 = vmatprep.subr.bf16.mxu0 0
        %369 = vmatpush1.bf16.msra.mxu0 0
        %370 = vmatprep.subr.bf16.mxu0 0
        %371 = vmatpush1.bf16.msra.mxu0 0
        %372 = vmatprep.subr.bf16.mxu0 0
        %373 = vmatpush1.bf16.msra.mxu0 0
        %374 = vmatprep.subr.bf16.mxu0 0
        %375 = vmatpush1.bf16.msra.mxu0 0
        %376 = vmatprep.subr.bf16.mxu0 0
        %377 = vmatpush1.bf16.msra.mxu0 0
        %378 = vmatprep.subr.bf16.mxu0 0
        %379 = vmatpush1.bf16.msra.mxu0 0
        %380 = vmatprep.subr.bf16.mxu0 0
        %381 = vmatpush1.bf16.msra.mxu0 0
        %382 = vmatprep.subr.bf16.mxu0 0
        %383 = vmatpush1.bf16.msra.mxu0 0
        %384 = vmatprep.subr.bf16.mxu0 0
        %385 = vmatpush1.bf16.msra.mxu0 0
        %386 = vmatprep.subr.bf16.mxu0 0
        %387 = vmatpush1.bf16.msra.mxu0 0
        %388 = vmatprep.subr.bf16.mxu0 0
        %389 = vmatpush1.bf16.msra.mxu0 0
        %390 = vmatprep.subr.bf16.mxu0 0
        %391 = vmatpush1.bf16.msra.mxu0 0
        %392 = vmatprep.subr.bf16.mxu0 0
        %393 = vmatpush1.bf16.msra.mxu0 0
        %394 = vmatprep.subr.bf16.mxu0 0
        %395 = vmatpush1.bf16.msra.mxu0 0
        %396 = vmatprep.subr.bf16.mxu0 0
        %397 = vmatpush1.bf16.msra.mxu0 0
        %398 = vmatprep.mubr.bf16.mxu0 0
        %399 = vmatmul.mubr.bf16.gmra.mrb[0].mxu0 %v280
        %v400 = vpop.f32.mrb[0].mxu0
        %v401 = vadd.f32 0.0, %v400
        %v402 = vpop.f32.mrb[0].mxu0
        %v403 = vpop.f32.mrb[0].mxu0
        %v404 = vadd.f32 0.0, %v403
        %v405 = vpop.f32.mrb[0].mxu0
        %406 = vmatprep.mubr.bf16.mxu0 0
        %407 = vmatmul.mubr.bf16.gmra.mrb[0].mxu0 %v283
        %v408 = vpop.f32.mrb[0].mxu0
        %v409 = vadd.f32 0.0, %v408
        %v410 = vpop.f32.mrb[0].mxu0
        %v411 = vpop.f32.mrb[0].mxu0
        %v412 = vadd.f32 0.0, %v411
        %v413 = vpop.f32.mrb[0].mxu0
        %414 = vdwg.mxu0
        %vm415 = vcmp.gt.f32.partialorder %v401, 0.0
        %vm416 = vcmp.gt.f32.partialorder %v404, 0.0
        %vm417 = vcmp.gt.f32.partialorder %v409, 0.0
        %vm418 = vcmp.gt.f32.partialorder %v412, 0.0
        %v419 = vsel %vm415, 1, 0
        %v420 = vsel %vm416, 1, 0
        %v421 = vsel %vm417, 1, 0
        %v422 = vsel %vm418, 1, 0
        %v423 = vcvt.s32.f32 %v419
        %v424 = vcvt.s32.f32 %v420
        %v425 = vcvt.s32.f32 %v421
        %v426 = vcvt.s32.f32 %v422
        %v427 = vpack.c.bf16 %v424, %v423
        %v428 = vpack.c.bf16 %v426, %v425
        %v431 = vunpack.c.l.b16 %v427
        %v432 = vunpack.c.h.b16 %v427
        %v433 = vunpack.c.l.b16 %v428
        %v434 = vunpack.c.h.b16 %v428
        %v435 = vpack.c.b16 %v431, %v431
        %v436 = vpack.c.b16 %v432, %v432
        %v437 = vpack.c.b16 %v433, %v433
        %v438 = vpack.c.b16 %v434, %v434
        %s443 = scalar_lea.vmem %s189, 16 [#allocation5]
        %444 = vst [vmem:[%s443] sm:$0xf] %v435
        %445 = vst [vmem:[%s443 + $0x4] sm:$0xf] %v436
        %446 = vst [vmem:[%s443 + $0x8] sm:$0xf] %v437
        %447 = vst [vmem:[%s443 + $0xc] sm:$0xf] %v438
        %s448 = sand.u32 %s96, 1
        %s449 = scalar_lea.sflag [#allocation4], %s448
        %s450 = sand.u32 %s96, 1
        %s451 = smul.addr %s450, 32
        %s452 = scalar_lea.vmem [#allocation5], %s451
        // Predicated region
        $region37: #{tpu_custom_call.1} parent=31 // pred_check
          %p453 = pneg %p106
        $region38: #{tpu_custom_call.1} parent=31 // pred_check_branch
          %455 = sbr.rel (%p453) target = $region40
        $region39: #{tpu_custom_call.1} parent=31 // pred_region
          %s456 = smul.u32 2, %s20
          %s458 = ssub.s32 512, 512
          %459 = vsyncadd %s449, %s458
          %s460 = smul.addr %s456, 4
          %s461 = smul.addr %s460, 64
          %s462 = scalar_lea.hbm %s3, %s461
          %s463 = sshll.u32 %s452, 4
          %s464 = int_to_ptr.vmem [resolvable:$true] %s463
          %469 = dma.vmem_to_hbm [thread:$0]  %s464, 512, %s462, %s449, 64, 64, 4
        $region40: #{tpu_custom_call.1} parent=31 // pred_fallthru
          _
      $region32: #{tpu_custom_call.1} parent=5 // pred_fallthru
        _
      %p470 = scmp.le.s32.totalorder 2, %s15
      // Predicated region
      $region41: #{tpu_custom_call.1} parent=5 // pred_check
        %p471 = pneg %p470
      $region42: #{tpu_custom_call.1} parent=5 // pred_check_branch
        %473 = sbr.rel (%p471) target = $region44
      $region43: #{tpu_custom_call.1} parent=5 // pred_region
        %s474 = ssub.s32 %s15, 2
        // Predicated region
        $region45: #{tpu_custom_call.1} parent=43 // pred_check
          %p475 = pneg %p112
        $region46: #{tpu_custom_call.1} parent=43 // pred_check_branch
          %477 = sbr.rel (%p475) target = $region48
        $region47: #{tpu_custom_call.1} parent=43 // pred_region
          %s478 = sand.u32 %s97, 1
          %s479 = scalar_lea.sflag [#allocation4], %s478
          %s480 = sand.u32 %s97, 1
          %s481 = smul.addr %s480, 32
          %s482 = scalar_lea.vmem [#allocation5], %s481
          %483 = dma.done %s479, 512
        $region48: #{tpu_custom_call.1} parent=43 // pred_fallthru
          _
      $region44: #{tpu_custom_call.1} parent=5 // pred_fallthru
        _
    $region6: #{tpu_custom_call.1} parent=1 // loop_footer
      %s19 = sadd.s32 1, %s15
    $region7: #{tpu_custom_call.1} parent=1 // loop_footer_branch
      %14 = sbr.rel target = $region3
    $region8: #{tpu_custom_call.1} parent=1 // loop_exit
      _
    %484 = vsyncpa [#allocation3], 1
    %s485 = scalar_lea.sflag [#allocation3], 1
    %486 = vsyncpa %s485, 1
    %487 = vsyncpa [#allocation4], 1
    %s488 = scalar_lea.sflag [#allocation4], 1
    %489 = vsyncpa %s488, 1

</llo_original>
